<compile_context>
chip_gen: v5e
topology: v5e:2x2
jax: 0.10.0
libtpu: 0.0.40
codegen_flags: <defaults>
</compile_context>

<pallas_src>
import numpy as np
import jax
import jax.numpy as jnp
from jax import lax
from jax.experimental import pallas as pl
from jax.experimental.pallas import tpu as pltpu

EPS = 1e-12              # matches torch.nn.functional.normalize default eps
TOTAL_FEATURES = 360 * 2  # fixed by the module (flattened feature dim must be 720)


def _round_up(x, m):
    return ((x + m - 1) // m) * m


def _rf_kernel(x_ref, sel_ref, o_ref):
    # x_ref:   (TB, F)     float32  -- flattened input tile
    # sel_ref: (F, K_pad)  float32  -- one-hot column-selection matrix (zero-padded cols)
    # o_ref:   (TB, K_pad) float32  -- normalized selected features
    x = x_ref[...]
    sel = sel_ref[...]
    # Column gather expressed as a matmul (MXU, static one-hot selection -> exact).
    xs = jnp.dot(x, sel, preferred_element_type=jnp.float32)
    # F.normalize(x, dim=-1): x / max(||x||_2, eps)  ==  x * rsqrt(max(sum(x^2), eps^2))
    ss = jnp.sum(xs * xs, axis=-1, keepdims=True)
    inv = lax.rsqrt(jnp.maximum(ss, EPS * EPS))   # EUP rsqrt; padded zero rows -> 0 output
    o_ref[...] = xs * inv


def random_features_forward(x, sel_matrix, k, *, tb=512):
    """x: (N, C, H, W) with C*H*W == 720.
    sel_matrix: (720, K_pad) one-hot float32 with K_pad a multiple of 128.
    k: true number of selected columns (output is (N, k))."""
    B = x.shape[0]
    x_flat = x.reshape(B, -1).astype(jnp.float32)
    F_dim, K_pad = sel_matrix.shape
    assert x_flat.shape[1] == F_dim

    # Batch tile: multiple of 8 (sublane), capped at `tb`; pad batch with zero rows.
    TB = min(tb, _round_up(B, 8))
    B_pad = _round_up(B, TB)
    if B_pad != B:
        x_flat = jnp.pad(x_flat, ((0, B_pad - B), (0, 0)))

    grid = (B_pad // TB,)

    cost = pl.CostEstimate(
        flops=2 * B_pad * F_dim * K_pad,
        transcendentals=B_pad,
        bytes_accessed=B_pad * F_dim * 4 + F_dim * K_pad * 4 + B_pad * K_pad * 4,
    )

    out = pl.pallas_call(
        _rf_kernel,
        out_shape=jax.ShapeDtypeStruct((B_pad, K_pad), jnp.float32),
        grid=grid,
        in_specs=[
            # x: one batch tile per grid step (pipelined HBM reads).
            pl.BlockSpec((TB, F_dim), lambda i: (i, 0)),
            # sel: constant block index -> DMA'd once, resident across all steps.
            pl.BlockSpec((F_dim, K_pad), lambda i: (0, 0)),
        ],
        out_specs=pl.BlockSpec((TB, K_pad), lambda i: (i, 0)),
        compiler_params=pltpu.CompilerParams(
            dimension_semantics=("parallel",),   # megacore split on v7x
            vmem_limit_bytes=32 * 1024 * 1024,   # plenty for these tiles on all gens
        ),
        cost_estimate=cost,
    )(x_flat, sel_matrix)

    # Drop batch padding and lane padding.
    return out[:B, :k]


def make_selection(num_features, seed=0):
    """Deterministic equivalent of `np.random.permutation(720) < num_features + 1`.
    Returns (boolean mask, padded one-hot selection matrix (720, K_pad), true K)."""
    rng = np.random.RandomState(seed)
    inds = rng.permutation(TOTAL_FEATURES) < (num_features + 1)
    sel_idx = np.nonzero(inds)[0]
    K = sel_idx.shape[0]
    K_pad = _round_up(max(K, 1), 128)            # lane-dense output (128-multiple)
    sel = np.zeros((TOTAL_FEATURES, K_pad), dtype=np.float32)
    sel[sel_idx, np.arange(K)] = 1.0             # padded columns stay all-zero
    return inds, jnp.asarray(sel), K


if __name__ == "__main__":
    # Small example consistent with the module: flattened dim must be 720.
    # N=2, C=2, H=18, W=20  ->  2*18*20 = 720 features per example.
    N, C, H, W = 2, 2, 18, 20
    num_features = 100   # -> K = 101 selected columns (exercises K padding to 128)

    key = jax.random.PRNGKey(0)
    x = jax.random.normal(key, (N, C, H, W), dtype=jnp.float32)

    inds, sel_matrix, K = make_selection(num_features, seed=0)

    out = random_features_forward(x, sel_matrix, K)
    out = jax.block_until_ready(out)

    # Pure-JAX reference of the PyTorch semantics for a sanity check.
    x_flat = x.reshape(N, -1)
    ref = x_flat[:, np.nonzero(inds)[0]]
    ref = ref / jnp.maximum(jnp.linalg.norm(ref, axis=-1, keepdims=True), EPS)
    assert out.shape == (N, K)
    np.testing.assert_allclose(np.asarray(out), np.asarray(ref), rtol=1e-5, atol=1e-5)

    print("KERNEL_OK")
</pallas_src>

<mosaic_0001>
module attributes {stable_mosaic.version = 11 : i64} {
  func.func @_rf_kernel(%arg0: i32, %arg1: memref<8x720xf32, #tpu.memory_space<vmem>>, %arg2: memref<720x128xf32, #tpu.memory_space<vmem>>, %arg3: memref<8x128xf32, #tpu.memory_space<vmem>>) attributes {dimension_semantics = [#tpu.dimension_semantics<parallel>], iteration_bounds = array<i64: 1>, scalar_prefetch = 0 : i64, scratch_operands = 0 : i64, tpu.core_type = #tpu.core_type<tc>, window_params = [{transform_indices = @transform_0, window_bounds = array<i64: 8, 720>}, {pipeline_mode = #tpu.pipeline_mode<synchronous>, transform_indices = @transform_1, window_bounds = array<i64: 720, 128>}, {transform_indices = @transform_2, window_bounds = array<i64: 8, 128>}]} {
    %c0 = arith.constant 0 : index
    %c0_0 = arith.constant 0 : index
    %0 = vector.load %arg1[%c0, %c0_0] : memref<8x720xf32, #tpu.memory_space<vmem>>, vector<8x720xf32>
    %c0_1 = arith.constant 0 : index
    %c0_2 = arith.constant 0 : index
    %1 = vector.load %arg2[%c0_1, %c0_2] : memref<720x128xf32, #tpu.memory_space<vmem>>, vector<720x128xf32>
    %cst = arith.constant dense<0.000000e+00> : vector<8x128xf32>
    %2 = tpu.matmul %0, %1, %cst {dimension_numbers = #tpu.dot_dimension_numbers<[1], [0], [0], [1], [0, 0, 1, 1], [], []>} : vector<8x720xf32>, vector<720x128xf32>, vector<8x128xf32> -> vector<8x128xf32>
    %3 = arith.mulf %2, %2 : vector<8x128xf32>
    %cst_3 = arith.constant dense<0.000000e+00> : vector<8xf32>
    %4 = vector.multi_reduction <add>, %3, %cst_3 [1] : vector<8x128xf32> to vector<8xf32>
    %5 = vector.shape_cast %4 : vector<8xf32> to vector<8x1xf32>
    %cst_4 = arith.constant 1.000000e-24 : f32
    %6 = vector.broadcast %cst_4 : f32 to vector<8x1xf32>
    %7 = arith.maximumf %5, %6 : vector<8x1xf32>
    %8 = math.rsqrt %7 : vector<8x1xf32>
    %9 = vector.broadcast %8 : vector<8x1xf32> to vector<8x128xf32>
    %10 = arith.mulf %2, %9 : vector<8x128xf32>
    %c0_5 = arith.constant 0 : index
    %c0_6 = arith.constant 0 : index
    %11 = vector.load %arg3[%c0_5, %c0_6] : memref<8x128xf32, #tpu.memory_space<vmem>>, vector<8x128xf32>
    tpu.vector_store %arg3[%c0_5, %c0_6], %10 {strides = array<i32>} : memref<8x128xf32, #tpu.memory_space<vmem>>, vector<8x128xf32>,
    return
  }
  func.func @transform_0(%arg0: i32) -> (i32, i32) {
    %c0_i32 = arith.constant 0 : i32
    %c0_i32_0 = arith.constant 0 : i32
    return %arg0, %c0_i32 : i32, i32
  }
  func.func @transform_1(%arg0: i32) -> (i32, i32) {
    %c0_i32 = arith.constant 0 : i32
    %c0_i32_0 = arith.constant 0 : i32
    %c0_i32_1 = arith.constant 0 : i32
    return %c0_i32, %c0_i32_0 : i32, i32
  }
  func.func @transform_2(%arg0: i32) -> (i32, i32) {
    %c0_i32 = arith.constant 0 : i32
    %c0_i32_0 = arith.constant 0 : i32
    return %arg0, %c0_i32 : i32, i32
  }
}

</mosaic_0001>

<llo_original>
// kernel: tpu_custom_call.1
$region0: #{tpu_custom_call.1}
  #allocation0 [shape = 'u32[]', space=smem, size = 0x4, offset = 0x4, fixed_abs, tag = 'smem constant byte address 0x4 - core index']
  #allocation1 [shape = 'u32[72,128]{1,0:T(1,128)}', space=vmem, size = 0x9000, scoped, tag = 'internal scratch']
  %s0 = inlined_call_operand.hbm [shape: f32[8,720], index: 0, kind: input, shape index: {}]
  %s1 = inlined_call_operand.hbm [shape: f32[720,128], index: 1, kind: input, shape index: {}]
  %s2 = inlined_call_operand.hbm [shape: f32[8,128], index: 2, kind: output, shape index: {}]
  %s3 = sld [smem:[#allocation0]]
  $region26: #{tpu_custom_call.1} parent=0
    _
  %s5 = ssub.s32 1, %s3
  %s6 = scalar_select 0, %s5, %s3
  $region1: #{tpu_custom_call.1} parent=0
    #allocation2 [shape = 'u8[24576]{0}', space=vmem, size = 0x6000, scoped, tag = 'input window, operand 0, single buffered']
    #allocation3 [shape = 's32[1]{0}', space=sflag, size = 0x4, scoped, tag = 'scoped memory for tpu_custom_call.1']
    #allocation4 [shape = 's32[1]{0}', space=sflag, size = 0x4, scoped, tag = 'scoped memory for tpu_custom_call.1']
    #allocation5 [shape = 'u8[368640]{0}', space=vmem, size = 0x5a000, scoped, tag = 'input window, operand 1, single buffered']
    #allocation6 [shape = 's32[1]{0}', space=sflag, size = 0x4, scoped, tag = 'scoped memory for tpu_custom_call.1']
    #allocation7 [shape = 'u8[4096]{0}', space=vmem, size = 0x1000, scoped, tag = 'output window, operand 0, single buffered']
    %7 = vsyncpa [#allocation3], 0
    %8 = vsyncpa [#allocation6], 0
    %9 = vsyncpa [#allocation4], 0
    // Predicated region
    $region2: #{tpu_custom_call.1} parent=1 // pred_check
      _
    $region3: #{tpu_custom_call.1} parent=1 // pred_check_branch
      %11 = sbr.rel (0) target = $region5
    $region4: #{tpu_custom_call.1} parent=1 // pred_region
      %13 = vsyncadd [#allocation3], 0
      %s15 = sshll.u32 %s0, 4
      %s16 = int_to_ptr.hbm [resolvable:$true] %s15
      %s17 = sshll.u32 [#allocation2], 4
      %s18 = int_to_ptr.vmem [resolvable:$true] %s17
      %20 = dma.hbm_to_vmem [thread:$0]  %s16, 768, %s18, [#allocation3]
    $region5: #{tpu_custom_call.1} parent=1 // pred_fallthru
      _
    // Predicated region
    $region6: #{tpu_custom_call.1} parent=1 // pred_check
      _
    $region7: #{tpu_custom_call.1} parent=1 // pred_check_branch
      %22 = sbr.rel (0) target = $region9
    $region8: #{tpu_custom_call.1} parent=1 // pred_region
      %24 = vsyncadd [#allocation6], 0
      %s25 = sshll.u32 %s1, 4
      %s26 = int_to_ptr.hbm [resolvable:$true] %s25
      %s27 = sshll.u32 [#allocation5], 4
      %s28 = int_to_ptr.vmem [resolvable:$true] %s27
      %33 = dma.hbm_to_vmem [thread:$0]  %s26, 11520, %s28, [#allocation6], 128, 128, 8
    $region9: #{tpu_custom_call.1} parent=1 // pred_fallthru
      _
    // Predicated region
    $region10: #{tpu_custom_call.1} parent=1 // pred_check
      _
    $region11: #{tpu_custom_call.1} parent=1 // pred_check_branch
      %35 = sbr.rel (0) target = $region13
    $region12: #{tpu_custom_call.1} parent=1 // pred_region
      %37 = dma.done [#allocation3], 768
    $region13: #{tpu_custom_call.1} parent=1 // pred_fallthru
      _
    // Predicated region
    $region14: #{tpu_custom_call.1} parent=1 // pred_check
      _
    $region15: #{tpu_custom_call.1} parent=1 // pred_check_branch
      %39 = sbr.rel (0) target = $region17
    $region16: #{tpu_custom_call.1} parent=1 // pred_region
      %41 = dma.done [#allocation6], 11520
    $region17: #{tpu_custom_call.1} parent=1 // pred_fallthru
      _
    %v42 = vld [vmem:[#allocation2] sm:$0xff]
    %v43 = vld [vmem:[#allocation2 + $0x8] sm:$0xff]
    %v44 = vld [vmem:[#allocation2 + $0x10] sm:$0xff]
    %v45 = vld [vmem:[#allocation2 + $0x18] sm:$0xff]
    %v46 = vld [vmem:[#allocation2 + $0x20] sm:$0xff]
    %v47 = vld [vmem:[#allocation2 + $0x28] sm:$0xff]
    %v48 = vld [vmem:[#allocation5] sm:$0xff]
    %v49 = vld [vmem:[#allocation5 + $0x8] sm:$0xff]
    %v50 = vld [vmem:[#allocation5 + $0x10] sm:$0xff]
    %v51 = vld [vmem:[#allocation5 + $0x18] sm:$0xff]
    %v52 = vld [vmem:[#allocation5 + $0x20] sm:$0xff]
    %v53 = vld [vmem:[#allocation5 + $0x28] sm:$0xff]
    %v54 = vld [vmem:[#allocation5 + $0x30] sm:$0xff]
    %v55 = vld [vmem:[#allocation5 + $0x38] sm:$0xff]
    %v56 = vld [vmem:[#allocation5 + $0x40] sm:$0xff]
    %v57 = vld [vmem:[#allocation5 + $0x48] sm:$0xff]
    %v58 = vld [vmem:[#allocation5 + $0x50] sm:$0xff]
    %v59 = vld [vmem:[#allocation5 + $0x58] sm:$0xff]
    %v60 = vld [vmem:[#allocation5 + $0x60] sm:$0xff]
    %v61 = vld [vmem:[#allocation5 + $0x68] sm:$0xff]
    %v62 = vld [vmem:[#allocation5 + $0x70] sm:$0xff]
    %v63 = vld [vmem:[#allocation5 + $0x78] sm:$0xff]
    %v64 = vld [vmem:[#allocation5 + $0x80] sm:$0xff]
    %v65 = vld [vmem:[#allocation5 + $0x88] sm:$0xff]
    %v66 = vld [vmem:[#allocation5 + $0x90] sm:$0xff]
    %v67 = vld [vmem:[#allocation5 + $0x98] sm:$0xff]
    %v68 = vld [vmem:[#allocation5 + $0xa0] sm:$0xff]
    %v69 = vld [vmem:[#allocation5 + $0xa8] sm:$0xff]
    %v70 = vld [vmem:[#allocation5 + $0xb0] sm:$0xff]
    %v71 = vld [vmem:[#allocation5 + $0xb8] sm:$0xff]
    %v72 = vld [vmem:[#allocation5 + $0xc0] sm:$0xff]
    %v73 = vld [vmem:[#allocation5 + $0xc8] sm:$0xff]
    %v74 = vld [vmem:[#allocation5 + $0xd0] sm:$0xff]
    %v75 = vld [vmem:[#allocation5 + $0xd8] sm:$0xff]
    %v76 = vld [vmem:[#allocation5 + $0xe0] sm:$0xff]
    %v77 = vld [vmem:[#allocation5 + $0xe8] sm:$0xff]
    %v78 = vld [vmem:[#allocation5 + $0xf0] sm:$0xff]
    %v79 = vld [vmem:[#allocation5 + $0xf8] sm:$0xff]
    %v80 = vld [vmem:[#allocation5 + $0x100] sm:$0xff]
    %v81 = vld [vmem:[#allocation5 + $0x108] sm:$0xff]
    %v82 = vld [vmem:[#allocation5 + $0x110] sm:$0xff]
    %v83 = vld [vmem:[#allocation5 + $0x118] sm:$0xff]
    %v84 = vld [vmem:[#allocation5 + $0x120] sm:$0xff]
    %v85 = vld [vmem:[#allocation5 + $0x128] sm:$0xff]
    %v86 = vld [vmem:[#allocation5 + $0x130] sm:$0xff]
    %v87 = vld [vmem:[#allocation5 + $0x138] sm:$0xff]
    %v88 = vld [vmem:[#allocation5 + $0x140] sm:$0xff]
    %v89 = vld [vmem:[#allocation5 + $0x148] sm:$0xff]
    %v90 = vld [vmem:[#allocation5 + $0x150] sm:$0xff]
    %v91 = vld [vmem:[#allocation5 + $0x158] sm:$0xff]
    %v92 = vld [vmem:[#allocation5 + $0x160] sm:$0xff]
    %v93 = vld [vmem:[#allocation5 + $0x168] sm:$0xff]
    %v94 = vld [vmem:[#allocation5 + $0x170] sm:$0xff]
    %v95 = vld [vmem:[#allocation5 + $0x178] sm:$0xff]
    %v96 = vld [vmem:[#allocation5 + $0x180] sm:$0xff]
    %v97 = vld [vmem:[#allocation5 + $0x188] sm:$0xff]
    %v98 = vld [vmem:[#allocation5 + $0x190] sm:$0xff]
    %v99 = vld [vmem:[#allocation5 + $0x198] sm:$0xff]
    %v100 = vld [vmem:[#allocation5 + $0x1a0] sm:$0xff]
    %v101 = vld [vmem:[#allocation5 + $0x1a8] sm:$0xff]
    %v102 = vld [vmem:[#allocation5 + $0x1b0] sm:$0xff]
    %v103 = vld [vmem:[#allocation5 + $0x1b8] sm:$0xff]
    %v104 = vld [vmem:[#allocation5 + $0x1c0] sm:$0xff]
    %v105 = vld [vmem:[#allocation5 + $0x1c8] sm:$0xff]
    %v106 = vld [vmem:[#allocation5 + $0x1d0] sm:$0xff]
    %v107 = vld [vmem:[#allocation5 + $0x1d8] sm:$0xff]
    %v108 = vld [vmem:[#allocation5 + $0x1e0] sm:$0xff]
    %v109 = vld [vmem:[#allocation5 + $0x1e8] sm:$0xff]
    %v110 = vld [vmem:[#allocation5 + $0x1f0] sm:$0xff]
    %v111 = vld [vmem:[#allocation5 + $0x1f8] sm:$0xff]
    %v112 = vld [vmem:[#allocation5 + $0x200] sm:$0xff]
    %v113 = vld [vmem:[#allocation5 + $0x208] sm:$0xff]
    %v114 = vld [vmem:[#allocation5 + $0x210] sm:$0xff]
    %v115 = vld [vmem:[#allocation5 + $0x218] sm:$0xff]
    %v116 = vld [vmem:[#allocation5 + $0x220] sm:$0xff]
    %v117 = vld [vmem:[#allocation5 + $0x228] sm:$0xff]
    %v118 = vld [vmem:[#allocation5 + $0x230] sm:$0xff]
    %v119 = vld [vmem:[#allocation5 + $0x238] sm:$0xff]
    %v120 = vld [vmem:[#allocation5 + $0x240] sm:$0xff]
    %v121 = vld [vmem:[#allocation5 + $0x248] sm:$0xff]
    %v122 = vld [vmem:[#allocation5 + $0x250] sm:$0xff]
    %v123 = vld [vmem:[#allocation5 + $0x258] sm:$0xff]
    %v124 = vld [vmem:[#allocation5 + $0x260] sm:$0xff]
    %v125 = vld [vmem:[#allocation5 + $0x268] sm:$0xff]
    %v126 = vld [vmem:[#allocation5 + $0x270] sm:$0xff]
    %v127 = vld [vmem:[#allocation5 + $0x278] sm:$0xff]
    %v128 = vld [vmem:[#allocation5 + $0x280] sm:$0xff]
    %v129 = vld [vmem:[#allocation5 + $0x288] sm:$0xff]
    %v130 = vld [vmem:[#allocation5 + $0x290] sm:$0xff]
    %v131 = vld [vmem:[#allocation5 + $0x298] sm:$0xff]
    %v132 = vld [vmem:[#allocation5 + $0x2a0] sm:$0xff]
    %v133 = vld [vmem:[#allocation5 + $0x2a8] sm:$0xff]
    %v134 = vld [vmem:[#allocation5 + $0x2b0] sm:$0xff]
    %v135 = vld [vmem:[#allocation5 + $0x2b8] sm:$0xff]
    %v136 = vld [vmem:[#allocation5 + $0x2c0] sm:$0xff]
    %v137 = vld [vmem:[#allocation5 + $0x2c8] sm:$0xff]
    %vm138 = vcmask 654336
    %v140 = vsel %vm138, %v47, 0
    %142 = vmatpush.msra.mxu0 %v63
    %143 = vmatpush.msra.mxu0 %v62
    %144 = vmatpush.msra.mxu0 %v61
    %145 = vmatpush.msra.mxu0 %v60
    %146 = vmatpush.msra.mxu0 %v59
    %147 = vmatpush.msra.mxu0 %v58
    %148 = vmatpush.msra.mxu0 %v57
    %149 = vmatpush.msra.mxu0 %v56
    %150 = vmatpush.msra.mxu0 %v55
    %151 = vmatpush.msra.mxu0 %v54
    %152 = vmatpush.msra.mxu0 %v53
    %153 = vmatpush.msra.mxu0 %v52
    %154 = vmatpush.msra.mxu0 %v51
    %155 = vmatpush.msra.mxu0 %v50
    %156 = vmatpush.msra.mxu0 %v49
    %157 = vmatpush.msra.mxu0 %v48
    %158 = vmatmul.f32.gmra.mxu0 %v42
    %v159 = vpop.f32.mrf.mxu0
    %v160 = vadd.f32 0.0, %v159
    %161 = vdwg.mxu0
    %162 = vmatpush.msra.mxu0 %v79
    %163 = vmatpush.msra.mxu0 %v78
    %164 = vmatpush.msra.mxu0 %v77
    %165 = vmatpush.msra.mxu0 %v76
    %166 = vmatpush.msra.mxu0 %v75
    %167 = vmatpush.msra.mxu0 %v74
    %168 = vmatpush.msra.mxu0 %v73
    %169 = vmatpush.msra.mxu0 %v72
    %170 = vmatpush.msra.mxu0 %v71
    %171 = vmatpush.msra.mxu0 %v70
    %172 = vmatpush.msra.mxu0 %v69
    %173 = vmatpush.msra.mxu0 %v68
    %174 = vmatpush.msra.mxu0 %v67
    %175 = vmatpush.msra.mxu0 %v66
    %176 = vmatpush.msra.mxu0 %v65
    %177 = vmatpush.msra.mxu0 %v64
    %178 = vmatmul.f32.gmra.mxu0 %v43
    %v179 = vpop.f32.mrf.mxu0
    %v180 = vadd.f32 %v160, %v179
    %181 = vdwg.mxu0
    %182 = vmatpush.msra.mxu0 %v95
    %183 = vmatpush.msra.mxu0 %v94
    %184 = vmatpush.msra.mxu0 %v93
    %185 = vmatpush.msra.mxu0 %v92
    %186 = vmatpush.msra.mxu0 %v91
    %187 = vmatpush.msra.mxu0 %v90
    %188 = vmatpush.msra.mxu0 %v89
    %189 = vmatpush.msra.mxu0 %v88
    %190 = vmatpush.msra.mxu0 %v87
    %191 = vmatpush.msra.mxu0 %v86
    %192 = vmatpush.msra.mxu0 %v85
    %193 = vmatpush.msra.mxu0 %v84
    %194 = vmatpush.msra.mxu0 %v83
    %195 = vmatpush.msra.mxu0 %v82
    %196 = vmatpush.msra.mxu0 %v81
    %197 = vmatpush.msra.mxu0 %v80
    %198 = vmatmul.f32.gmra.mxu0 %v44
    %v199 = vpop.f32.mrf.mxu0
    %v200 = vadd.f32 %v180, %v199
    %201 = vdwg.mxu0
    %202 = vmatpush.msra.mxu0 %v111
    %203 = vmatpush.msra.mxu0 %v110
    %204 = vmatpush.msra.mxu0 %v109
    %205 = vmatpush.msra.mxu0 %v108
    %206 = vmatpush.msra.mxu0 %v107
    %207 = vmatpush.msra.mxu0 %v106
    %208 = vmatpush.msra.mxu0 %v105
    %209 = vmatpush.msra.mxu0 %v104
    %210 = vmatpush.msra.mxu0 %v103
    %211 = vmatpush.msra.mxu0 %v102
    %212 = vmatpush.msra.mxu0 %v101
    %213 = vmatpush.msra.mxu0 %v100
    %214 = vmatpush.msra.mxu0 %v99
    %215 = vmatpush.msra.mxu0 %v98
    %216 = vmatpush.msra.mxu0 %v97
    %217 = vmatpush.msra.mxu0 %v96
    %218 = vmatmul.f32.gmra.mxu0 %v45
    %v219 = vpop.f32.mrf.mxu0
    %v220 = vadd.f32 %v200, %v219
    %221 = vdwg.mxu0
    %222 = vmatpush.msra.mxu0 %v127
    %223 = vmatpush.msra.mxu0 %v126
    %224 = vmatpush.msra.mxu0 %v125
    %225 = vmatpush.msra.mxu0 %v124
    %226 = vmatpush.msra.mxu0 %v123
    %227 = vmatpush.msra.mxu0 %v122
    %228 = vmatpush.msra.mxu0 %v121
    %229 = vmatpush.msra.mxu0 %v120
    %230 = vmatpush.msra.mxu0 %v119
    %231 = vmatpush.msra.mxu0 %v118
    %232 = vmatpush.msra.mxu0 %v117
    %233 = vmatpush.msra.mxu0 %v116
    %234 = vmatpush.msra.mxu0 %v115
    %235 = vmatpush.msra.mxu0 %v114
    %236 = vmatpush.msra.mxu0 %v113
    %237 = vmatpush.msra.mxu0 %v112
    %238 = vmatmul.f32.gmra.mxu0 %v46
    %v239 = vpop.f32.mrf.mxu0
    %v240 = vadd.f32 %v220, %v239
    %241 = vdwg.mxu0
    %242 = vmatpush.msra.mxu0 0.0
    %243 = vmatpush.msra.mxu0 0.0
    %244 = vmatpush.msra.mxu0 0.0
    %245 = vmatpush.msra.mxu0 0.0
    %246 = vmatpush.msra.mxu0 0.0
    %247 = vmatpush.msra.mxu0 0.0
    %248 = vmatpush.msra.mxu0 %v137
    %249 = vmatpush.msra.mxu0 %v136
    %250 = vmatpush.msra.mxu0 %v135
    %251 = vmatpush.msra.mxu0 %v134
    %252 = vmatpush.msra.mxu0 %v133
    %253 = vmatpush.msra.mxu0 %v132
    %254 = vmatpush.msra.mxu0 %v131
    %255 = vmatpush.msra.mxu0 %v130
    %256 = vmatpush.msra.mxu0 %v129
    %257 = vmatpush.msra.mxu0 %v128
    %258 = vmatmul.f32.gmra.mxu0 %v140
    %v259 = vpop.f32.mrf.mxu0
    %v260 = vadd.f32 %v240, %v259
    %261 = vdwg.mxu0
    %v262 = vmul.f32 %v260, %v260
    %263 = vadd.xlane.f32.xlu0 %v262
    %v264 = vpop.xlane.xlu0 %263
    %v265 = vmax.f32 %v264, 1e-24
    %v266 = vrsqrt.pop %v265
    %v267 = vmul.f32 %v266, %v265
    %v268 = vmul.f32 %v267, %v266
    %v269 = vmul.f32 0.5, %v268
    %v270 = vsub.f32 1.5, %v269
    %v271 = vmul.f32 %v266, %v270
    %vm272 = vweird.f32 %v265
    %vm273 = vweird.f32 %v266
    %vm274 = vmor %vm272, %vm273
    %v275 = vsel %vm274, %v266, %v271
    %v276 = vmul.f32 %v260, %v275
    %277 = vst [vmem:[#allocation7] sm:$0xff] %v276
    // Predicated region
    $region18: #{tpu_custom_call.1} parent=1 // pred_check
      _
    $region19: #{tpu_custom_call.1} parent=1 // pred_check_branch
      %279 = sbr.rel (0) target = $region21
    $region20: #{tpu_custom_call.1} parent=1 // pred_region
      %281 = vsyncadd [#allocation4], 0
      %s283 = sshll.u32 [#allocation7], 4
      %s284 = int_to_ptr.vmem [resolvable:$true] %s283
      %s285 = sshll.u32 %s2, 4
      %s286 = int_to_ptr.hbm [resolvable:$true] %s285
      %288 = dma.vmem_to_hbm [thread:$0]  %s284, 128, %s286, [#allocation4]
    $region21: #{tpu_custom_call.1} parent=1 // pred_fallthru
      _
    // Predicated region
    $region22: #{tpu_custom_call.1} parent=1 // pred_check
      _
    $region23: #{tpu_custom_call.1} parent=1 // pred_check_branch
      %290 = sbr.rel (0) target = $region25
    $region24: #{tpu_custom_call.1} parent=1 // pred_region
      %292 = dma.done [#allocation4], 128
    $region25: #{tpu_custom_call.1} parent=1 // pred_fallthru
      _
    %293 = vsyncpa [#allocation3], 1
    %294 = vsyncpa [#allocation6], 1
    %295 = vsyncpa [#allocation4], 1

</llo_original>
